<compile_context>
chip_gen: v6e
topology: v6e:2x2x1
jax: 0.10.0
libtpu: 0.0.40
codegen_flags: <defaults>
</compile_context>

<pallas_src>
import jax
import jax.numpy as jnp
from jax.experimental import pallas as pl
from jax.experimental.pallas import tpu as pltpu

EPS = 1e-5
LANE = 128  # hidden feature dims are zero-padded to the full 128-lane width


def _mlp_bn_kernel(x_ref, w_ref, p_ref, o_ref):
    """3x (Linear -> ReLU -> BatchNorm1d[train]) fully fused in VMEM.

    x_ref : (B, F)         real (unpadded) input
    w_ref : (3, 128, 128)  weight slabs, stored [in, out], zero padded
    p_ref : (9, 128)       rows = b1,g1,be1, b2,g2,be2, b3,g3,be3, zero padded
    o_ref : (B, out_size)  real (unpadded) output
    """
    B, F = x_ref.shape
    out_size = o_ref.shape[1]
    inv_b = 1.0 / B
    p = p_ref[...]  # (9, 128), loaded once

    def relu_bn(z, li):
        g = p[3 * li + 1]
        be = p[3 * li + 2]
        z = jnp.maximum(z, 0.0)                                   # VPU
        mean = jnp.sum(z, axis=0, keepdims=True) * inv_b          # XLU reduce
        centered = z - mean
        var = jnp.sum(centered * centered, axis=0, keepdims=True) * inv_b
        scale = g * jax.lax.rsqrt(var + EPS)                      # EUP
        return centered * scale + be                              # one FMA/elem

    x = x_ref[...].astype(jnp.float32)

    # Layer 1: K = F (no input padding needed; padded weight rows are zero
    # anyway, and F is sublane-aligned so the static slice is free).
    z = jnp.dot(x, w_ref[0, :F, :], preferred_element_type=jnp.float32) + p[0]
    h = relu_bn(z, 0)

    # Layers 2 & 3: lane-dense 128x128 MXU tiles (zero-padded weights keep the
    # padded activation columns identically zero).
    z = jnp.dot(h, w_ref[1], preferred_element_type=jnp.float32) + p[3]
    h = relu_bn(z, 1)
    z = jnp.dot(h, w_ref[2], preferred_element_type=jnp.float32) + p[6]
    h = relu_bn(z, 2)

    # Emit only the real output columns directly (no wrapper-side slice op).
    o_ref[...] = h[:, :out_size].astype(o_ref.dtype)


def pack_params(params, input_size, hidden_size, out_size):
    """Pack 12 small parameter arrays into two lane-dense, zero-padded slabs."""
    h2 = hidden_size // 2
    dims = [(input_size, h2), (h2, hidden_size), (hidden_size, out_size)]
    w_slab = jnp.zeros((3, LANE, LANE), jnp.float32)
    p_slab = jnp.zeros((9, LANE), jnp.float32)
    for i, (fi, fo) in enumerate(dims):
        assert fi <= LANE and fo <= LANE
        w_slab = w_slab.at[i, :fi, :fo].set(params[f"w{i + 1}"])
        p_slab = p_slab.at[3 * i, :fo].set(params[f"b{i + 1}"].reshape(-1))
        p_slab = p_slab.at[3 * i + 1, :fo].set(params[f"g{i + 1}"].reshape(-1))
        p_slab = p_slab.at[3 * i + 2, :fo].set(params[f"be{i + 1}"].reshape(-1))
    # Padded gamma/beta/bias lanes MUST stay zero so padded activation columns
    # remain exactly zero (a gamma of 1 there would leak rsqrt(eps)~316).
    return w_slab, p_slab


def neural_net_forward(x, w_slab, p_slab, out_size):
    """x: [B, input_size] f32 (unpadded).  Returns [B, out_size] f32."""
    B, F = x.shape

    flops = 2 * B * (F * LANE + LANE * LANE + LANE * LANE)  # three MXU passes
    bytes_accessed = 4 * (B * F + B * out_size + 3 * LANE * LANE + 9 * LANE)
    transcendentals = 3 * LANE  # one rsqrt per (padded) feature per layer

    vmem_spec = pl.BlockSpec(memory_space=pltpu.MemorySpace.VMEM)
    return pl.pallas_call(
        _mlp_bn_kernel,
        out_shape=jax.ShapeDtypeStruct((B, out_size), jnp.float32),
        in_specs=[vmem_spec, vmem_spec, vmem_spec],
        out_specs=vmem_spec,
        cost_estimate=pl.CostEstimate(
            flops=flops,
            transcendentals=transcendentals,
            bytes_accessed=bytes_accessed,
        ),
    )(x, w_slab, p_slab)


def init_params(key, input_size, hidden_size, out_size):
    """Deterministic param init mirroring the PyTorch module's shapes/init."""
    h2 = hidden_size // 2
    sizes = [(input_size, h2), (h2, hidden_size), (hidden_size, out_size)]
    params = {}
    for idx, (fan_in, fan_out) in enumerate(sizes, start=1):
        key, kw, kb = jax.random.split(key, 3)
        bound = 1.0 / jnp.sqrt(float(fan_in))  # PyTorch Linear default init
        params[f"w{idx}"] = jax.random.uniform(
            kw, (fan_in, fan_out), jnp.float32, -bound, bound)
        params[f"b{idx}"] = jax.random.uniform(
            kb, (fan_out,), jnp.float32, -bound, bound)
        params[f"g{idx}"] = jnp.ones((fan_out,), jnp.float32)    # BN gamma
        params[f"be{idx}"] = jnp.zeros((fan_out,), jnp.float32)  # BN beta
    return params


def _reference_forward(x, params):
    """Pure-JAX reference of the PyTorch module (training-mode BN)."""
    h = x
    for i in (1, 2, 3):
        z = h @ params[f"w{i}"] + params[f"b{i}"]
        z = jnp.maximum(z, 0.0)
        mean = jnp.mean(z, axis=0, keepdims=True)
        var = jnp.mean((z - mean) ** 2, axis=0, keepdims=True)  # biased var
        h = (z - mean) * jax.lax.rsqrt(var + EPS) * params[f"g{i}"] + params[f"be{i}"]
    return h


if __name__ == "__main__":
    # Small shapes consistent with the module: batch=8, input=32, hidden=64, out=16
    batch, input_size, hidden_size, out_size = 8, 32, 64, 16

    key = jax.random.PRNGKey(0)
    key, kx = jax.random.split(key)
    x = jax.random.normal(kx, (batch, input_size), jnp.float32)

    params = init_params(key, input_size, hidden_size, out_size)
    w_slab, p_slab = pack_params(params, input_size, hidden_size, out_size)

    out = neural_net_forward(x, w_slab, p_slab, out_size)
    out = jax.block_until_ready(out)

    # Sanity: shape, finiteness, and agreement with the pure-JAX reference.
    assert out.shape == (batch, out_size)
    assert bool(jnp.all(jnp.isfinite(out)))
    ref = _reference_forward(x, params)
    assert bool(jnp.allclose(out, ref, atol=1e-4, rtol=1e-4))
    print("KERNEL_OK")
</pallas_src>

<mosaic_0001>
module attributes {stable_mosaic.version = 11 : i64} {
  func.func @_mlp_bn_kernel(%arg0: memref<8x32xf32, #tpu.memory_space<vmem>>, %arg1: memref<3x128x128xf32, #tpu.memory_space<vmem>>, %arg2: memref<9x128xf32, #tpu.memory_space<vmem>>, %arg3: memref<8x16xf32, #tpu.memory_space<vmem>>) attributes {dimension_semantics = [], scalar_prefetch = 0 : i64, scratch_operands = 0 : i64, tpu.core_type = #tpu.core_type<tc>} {
    %c0 = arith.constant 0 : index
    %c0_0 = arith.constant 0 : index
    %0 = vector.load %arg2[%c0, %c0_0] : memref<9x128xf32, #tpu.memory_space<vmem>>, vector<9x128xf32>
    %c0_1 = arith.constant 0 : index
    %c0_2 = arith.constant 0 : index
    %1 = vector.load %arg0[%c0_1, %c0_2] : memref<8x32xf32, #tpu.memory_space<vmem>>, vector<8x32xf32>
    %c0_3 = arith.constant 0 : index
    %c0_4 = arith.constant 0 : index
    %c0_5 = arith.constant 0 : index
    %2 = vector.load %arg1[%c0_3, %c0_4, %c0_5] : memref<3x128x128xf32, #tpu.memory_space<vmem>>, vector<1x32x128xf32>
    %3 = vector.shape_cast %2 : vector<1x32x128xf32> to vector<32x128xf32>
    %cst = arith.constant dense<0.000000e+00> : vector<8x128xf32>
    %4 = tpu.matmul %1, %3, %cst {dimension_numbers = #tpu.dot_dimension_numbers<[1], [0], [0], [1], [0, 0, 1, 1], [], []>} : vector<8x32xf32>, vector<32x128xf32>, vector<8x128xf32> -> vector<8x128xf32>
    %5 = vector.extract_strided_slice %0 {offsets = [0, 0], sizes = [1, 128], strides = [1, 1]} : vector<9x128xf32> to vector<1x128xf32>
    %6 = vector.shape_cast %5 : vector<1x128xf32> to vector<128xf32>
    %7 = vector.shape_cast %6 : vector<128xf32> to vector<1x128xf32>
    %8 = vector.broadcast %7 : vector<1x128xf32> to vector<8x128xf32>
    %9 = arith.addf %4, %8 : vector<8x128xf32>
    %10 = vector.extract_strided_slice %0 {offsets = [1, 0], sizes = [1, 128], strides = [1, 1]} : vector<9x128xf32> to vector<1x128xf32>
    %11 = vector.shape_cast %10 : vector<1x128xf32> to vector<128xf32>
    %12 = vector.extract_strided_slice %0 {offsets = [2, 0], sizes = [1, 128], strides = [1, 1]} : vector<9x128xf32> to vector<1x128xf32>
    %13 = vector.shape_cast %12 : vector<1x128xf32> to vector<128xf32>
    %cst_6 = arith.constant 0.000000e+00 : f32
    %14 = vector.broadcast %cst_6 : f32 to vector<8x128xf32>
    %15 = arith.maximumf %9, %14 : vector<8x128xf32>
    %cst_7 = arith.constant dense<0.000000e+00> : vector<128xf32>
    %16 = vector.multi_reduction <add>, %15, %cst_7 [0] : vector<8x128xf32> to vector<128xf32>
    %17 = vector.shape_cast %16 : vector<128xf32> to vector<1x128xf32>
    %cst_8 = arith.constant 1.250000e-01 : f32
    %18 = vector.broadcast %cst_8 : f32 to vector<1x128xf32>
    %19 = arith.mulf %17, %18 : vector<1x128xf32>
    %20 = vector.broadcast %19 : vector<1x128xf32> to vector<8x128xf32>
    %21 = arith.subf %15, %20 : vector<8x128xf32>
    %22 = arith.mulf %21, %21 : vector<8x128xf32>
    %cst_9 = arith.constant dense<0.000000e+00> : vector<128xf32>
    %23 = vector.multi_reduction <add>, %22, %cst_9 [0] : vector<8x128xf32> to vector<128xf32>
    %24 = vector.shape_cast %23 : vector<128xf32> to vector<1x128xf32>
    %cst_10 = arith.constant 1.250000e-01 : f32
    %25 = vector.broadcast %cst_10 : f32 to vector<1x128xf32>
    %26 = arith.mulf %24, %25 : vector<1x128xf32>
    %cst_11 = arith.constant 9.99999974E-6 : f32
    %27 = vector.broadcast %cst_11 : f32 to vector<1x128xf32>
    %28 = arith.addf %26, %27 : vector<1x128xf32>
    %29 = math.rsqrt %28 : vector<1x128xf32>
    %30 = vector.shape_cast %11 : vector<128xf32> to vector<1x128xf32>
    %31 = arith.mulf %30, %29 : vector<1x128xf32>
    %32 = vector.broadcast %31 : vector<1x128xf32> to vector<8x128xf32>
    %33 = arith.mulf %21, %32 : vector<8x128xf32>
    %34 = vector.shape_cast %13 : vector<128xf32> to vector<1x128xf32>
    %35 = vector.broadcast %34 : vector<1x128xf32> to vector<8x128xf32>
    %36 = arith.addf %33, %35 : vector<8x128xf32>
    %c1 = arith.constant 1 : index
    %c0_12 = arith.constant 0 : index
    %c0_13 = arith.constant 0 : index
    %37 = vector.load %arg1[%c1, %c0_12, %c0_13] : memref<3x128x128xf32, #tpu.memory_space<vmem>>, vector<1x128x128xf32>
    %38 = vector.shape_cast %37 : vector<1x128x128xf32> to vector<128x128xf32>
    %cst_14 = arith.constant dense<0.000000e+00> : vector<8x128xf32>
    %39 = tpu.matmul %36, %38, %cst_14 {dimension_numbers = #tpu.dot_dimension_numbers<[1], [0], [0], [1], [0, 0, 1, 1], [], []>} : vector<8x128xf32>, vector<128x128xf32>, vector<8x128xf32> -> vector<8x128xf32>
    %40 = vector.extract_strided_slice %0 {offsets = [3, 0], sizes = [1, 128], strides = [1, 1]} : vector<9x128xf32> to vector<1x128xf32>
    %41 = vector.shape_cast %40 : vector<1x128xf32> to vector<128xf32>
    %42 = vector.shape_cast %41 : vector<128xf32> to vector<1x128xf32>
    %43 = vector.broadcast %42 : vector<1x128xf32> to vector<8x128xf32>
    %44 = arith.addf %39, %43 : vector<8x128xf32>
    %45 = vector.extract_strided_slice %0 {offsets = [4, 0], sizes = [1, 128], strides = [1, 1]} : vector<9x128xf32> to vector<1x128xf32>
    %46 = vector.shape_cast %45 : vector<1x128xf32> to vector<128xf32>
    %47 = vector.extract_strided_slice %0 {offsets = [5, 0], sizes = [1, 128], strides = [1, 1]} : vector<9x128xf32> to vector<1x128xf32>
    %48 = vector.shape_cast %47 : vector<1x128xf32> to vector<128xf32>
    %cst_15 = arith.constant 0.000000e+00 : f32
    %49 = vector.broadcast %cst_15 : f32 to vector<8x128xf32>
    %50 = arith.maximumf %44, %49 : vector<8x128xf32>
    %cst_16 = arith.constant dense<0.000000e+00> : vector<128xf32>
    %51 = vector.multi_reduction <add>, %50, %cst_16 [0] : vector<8x128xf32> to vector<128xf32>
    %52 = vector.shape_cast %51 : vector<128xf32> to vector<1x128xf32>
    %cst_17 = arith.constant 1.250000e-01 : f32
    %53 = vector.broadcast %cst_17 : f32 to vector<1x128xf32>
    %54 = arith.mulf %52, %53 : vector<1x128xf32>
    %55 = vector.broadcast %54 : vector<1x128xf32> to vector<8x128xf32>
    %56 = arith.subf %50, %55 : vector<8x128xf32>
    %57 = arith.mulf %56, %56 : vector<8x128xf32>
    %cst_18 = arith.constant dense<0.000000e+00> : vector<128xf32>
    %58 = vector.multi_reduction <add>, %57, %cst_18 [0] : vector<8x128xf32> to vector<128xf32>
    %59 = vector.shape_cast %58 : vector<128xf32> to vector<1x128xf32>
    %cst_19 = arith.constant 1.250000e-01 : f32
    %60 = vector.broadcast %cst_19 : f32 to vector<1x128xf32>
    %61 = arith.mulf %59, %60 : vector<1x128xf32>
    %cst_20 = arith.constant 9.99999974E-6 : f32
    %62 = vector.broadcast %cst_20 : f32 to vector<1x128xf32>
    %63 = arith.addf %61, %62 : vector<1x128xf32>
    %64 = math.rsqrt %63 : vector<1x128xf32>
    %65 = vector.shape_cast %46 : vector<128xf32> to vector<1x128xf32>
    %66 = arith.mulf %65, %64 : vector<1x128xf32>
    %67 = vector.broadcast %66 : vector<1x128xf32> to vector<8x128xf32>
    %68 = arith.mulf %56, %67 : vector<8x128xf32>
    %69 = vector.shape_cast %48 : vector<128xf32> to vector<1x128xf32>
    %70 = vector.broadcast %69 : vector<1x128xf32> to vector<8x128xf32>
    %71 = arith.addf %68, %70 : vector<8x128xf32>
    %c2 = arith.constant 2 : index
    %c0_21 = arith.constant 0 : index
    %c0_22 = arith.constant 0 : index
    %72 = vector.load %arg1[%c2, %c0_21, %c0_22] : memref<3x128x128xf32, #tpu.memory_space<vmem>>, vector<1x128x128xf32>
    %73 = vector.shape_cast %72 : vector<1x128x128xf32> to vector<128x128xf32>
    %cst_23 = arith.constant dense<0.000000e+00> : vector<8x128xf32>
    %74 = tpu.matmul %71, %73, %cst_23 {dimension_numbers = #tpu.dot_dimension_numbers<[1], [0], [0], [1], [0, 0, 1, 1], [], []>} : vector<8x128xf32>, vector<128x128xf32>, vector<8x128xf32> -> vector<8x128xf32>
    %75 = vector.extract_strided_slice %0 {offsets = [6, 0], sizes = [1, 128], strides = [1, 1]} : vector<9x128xf32> to vector<1x128xf32>
    %76 = vector.shape_cast %75 : vector<1x128xf32> to vector<128xf32>
    %77 = vector.shape_cast %76 : vector<128xf32> to vector<1x128xf32>
    %78 = vector.broadcast %77 : vector<1x128xf32> to vector<8x128xf32>
    %79 = arith.addf %74, %78 : vector<8x128xf32>
    %80 = vector.extract_strided_slice %0 {offsets = [7, 0], sizes = [1, 128], strides = [1, 1]} : vector<9x128xf32> to vector<1x128xf32>
    %81 = vector.shape_cast %80 : vector<1x128xf32> to vector<128xf32>
    %82 = vector.extract_strided_slice %0 {offsets = [8, 0], sizes = [1, 128], strides = [1, 1]} : vector<9x128xf32> to vector<1x128xf32>
    %83 = vector.shape_cast %82 : vector<1x128xf32> to vector<128xf32>
    %cst_24 = arith.constant 0.000000e+00 : f32
    %84 = vector.broadcast %cst_24 : f32 to vector<8x128xf32>
    %85 = arith.maximumf %79, %84 : vector<8x128xf32>
    %cst_25 = arith.constant dense<0.000000e+00> : vector<128xf32>
    %86 = vector.multi_reduction <add>, %85, %cst_25 [0] : vector<8x128xf32> to vector<128xf32>
    %87 = vector.shape_cast %86 : vector<128xf32> to vector<1x128xf32>
    %cst_26 = arith.constant 1.250000e-01 : f32
    %88 = vector.broadcast %cst_26 : f32 to vector<1x128xf32>
    %89 = arith.mulf %87, %88 : vector<1x128xf32>
    %90 = vector.broadcast %89 : vector<1x128xf32> to vector<8x128xf32>
    %91 = arith.subf %85, %90 : vector<8x128xf32>
    %92 = arith.mulf %91, %91 : vector<8x128xf32>
    %cst_27 = arith.constant dense<0.000000e+00> : vector<128xf32>
    %93 = vector.multi_reduction <add>, %92, %cst_27 [0] : vector<8x128xf32> to vector<128xf32>
    %94 = vector.shape_cast %93 : vector<128xf32> to vector<1x128xf32>
    %cst_28 = arith.constant 1.250000e-01 : f32
    %95 = vector.broadcast %cst_28 : f32 to vector<1x128xf32>
    %96 = arith.mulf %94, %95 : vector<1x128xf32>
    %cst_29 = arith.constant 9.99999974E-6 : f32
    %97 = vector.broadcast %cst_29 : f32 to vector<1x128xf32>
    %98 = arith.addf %96, %97 : vector<1x128xf32>
    %99 = math.rsqrt %98 : vector<1x128xf32>
    %100 = vector.shape_cast %81 : vector<128xf32> to vector<1x128xf32>
    %101 = arith.mulf %100, %99 : vector<1x128xf32>
    %102 = vector.broadcast %101 : vector<1x128xf32> to vector<8x128xf32>
    %103 = arith.mulf %91, %102 : vector<8x128xf32>
    %104 = vector.shape_cast %83 : vector<128xf32> to vector<1x128xf32>
    %105 = vector.broadcast %104 : vector<1x128xf32> to vector<8x128xf32>
    %106 = arith.addf %103, %105 : vector<8x128xf32>
    %107 = vector.extract_strided_slice %106 {offsets = [0, 0], sizes = [8, 16], strides = [1, 1]} : vector<8x128xf32> to vector<8x16xf32>
    %c0_30 = arith.constant 0 : index
    %c0_31 = arith.constant 0 : index
    %108 = vector.load %arg3[%c0_30, %c0_31] : memref<8x16xf32, #tpu.memory_space<vmem>>, vector<8x16xf32>
    tpu.vector_store %arg3[%c0_30, %c0_31], %107 {strides = array<i32>} : memref<8x16xf32, #tpu.memory_space<vmem>>, vector<8x16xf32>,
    return
  }
}

</mosaic_0001>

<llo_original>
// kernel: tpu_custom_call.1
$region0: #{tpu_custom_call.1}
  #allocation0 [shape = 'u32[]', space=smem, size = 0x4, offset = 0x4, fixed_abs, tag = 'smem constant byte address 0x4 - core index']
  #allocation1 [shape = 'u32[144,128]{1,0:T(1,128)}', space=vmem, size = 0x12000, scoped, tag = 'internal scratch']
  %s0 = inlined_call_operand.hbm [shape: f32[8,32], index: 0, kind: input, shape index: {}]
  %s1 = inlined_call_operand.hbm [shape: f32[3,128,128], index: 1, kind: input, shape index: {}]
  %s2 = inlined_call_operand.hbm [shape: f32[9,128], index: 2, kind: input, shape index: {}]
  %s3 = inlined_call_operand.hbm [shape: f32[8,16], index: 3, kind: output, shape index: {}]
  %s4 = sld [smem:[#allocation0]]
  $region34: #{tpu_custom_call.1} parent=0
    _
  %s6 = ssub.s32 1, %s4
  %s7 = scalar_select 0, %s6, %s4
  $region1: #{tpu_custom_call.1} parent=0
    #allocation2 [shape = 'u8[4096]{0}', space=vmem, size = 0x1000, scoped, tag = 'input window, operand 0, single buffered']
    #allocation3 [shape = 's32[1]{0}', space=sflag, size = 0x4, scoped, tag = 'scoped memory for tpu_custom_call.1']
    #allocation4 [shape = 's32[1]{0}', space=sflag, size = 0x4, scoped, tag = 'scoped memory for tpu_custom_call.1']
    #allocation5 [shape = 'u8[196608]{0}', space=vmem, size = 0x30000, scoped, tag = 'input window, operand 1, single buffered']
    #allocation6 [shape = 's32[1]{0}', space=sflag, size = 0x4, scoped, tag = 'scoped memory for tpu_custom_call.1']
    #allocation7 [shape = 'u8[8192]{0}', space=vmem, size = 0x2000, scoped, tag = 'input window, operand 2, single buffered']
    #allocation8 [shape = 'u8[4096]{0}', space=vmem, size = 0x1000, scoped, tag = 'output window, operand 0, single buffered']
    %8 = vsyncpa [#allocation3], 0
    %9 = vsyncpa [#allocation6], 0
    %10 = vsyncpa [#allocation4], 0
    // Predicated region
    $region2: #{tpu_custom_call.1} parent=1 // pred_check
      _
    $region3: #{tpu_custom_call.1} parent=1 // pred_check_branch
      %12 = sbr.rel (0) target = $region5
    $region4: #{tpu_custom_call.1} parent=1 // pred_region
      %s14 = ssub.s32 128, 128
      %15 = vsyncadd [#allocation3], %s14
      %s17 = sshll.u32 [#allocation2], 4
      %s18 = int_to_ptr.vmem [resolvable:$true] %s17
      %20 = dma.hbm_to_vmem [thread:$0]  %s0, 128, %s18, [#allocation3]
    $region5: #{tpu_custom_call.1} parent=1 // pred_fallthru
      _
    // Predicated region
    $region6: #{tpu_custom_call.1} parent=1 // pred_check
      _
    $region7: #{tpu_custom_call.1} parent=1 // pred_check_branch
      %22 = sbr.rel (0) target = $region9
    $region8: #{tpu_custom_call.1} parent=1 // pred_region
      %s24 = ssub.s32 6144, 6144
      %25 = vsyncadd [#allocation6], %s24
      %s26 = sshll.u32 [#allocation5], 4
      %s27 = int_to_ptr.vmem [resolvable:$true] %s26
      %32 = dma.hbm_to_vmem [thread:$0]  %s1, 6144, %s27, [#allocation6], 128, 128, 8
    $region9: #{tpu_custom_call.1} parent=1 // pred_fallthru
      _
    // Predicated region
    $region10: #{tpu_custom_call.1} parent=1 // pred_check
      _
    $region11: #{tpu_custom_call.1} parent=1 // pred_check_branch
      %34 = sbr.rel (0) target = $region13
    $region12: #{tpu_custom_call.1} parent=1 // pred_region
      %s36 = ssub.s32 256, 256
      %37 = vsyncadd [#allocation6], %s36
      %s38 = sshll.u32 [#allocation7], 4
      %s39 = int_to_ptr.vmem [resolvable:$true] %s38
      %44 = dma.hbm_to_vmem [thread:$0]  %s2, 256, %s39, [#allocation6], 128, 128, 8
    $region13: #{tpu_custom_call.1} parent=1 // pred_fallthru
      _
    // Predicated region
    $region14: #{tpu_custom_call.1} parent=1 // pred_check
      _
    $region15: #{tpu_custom_call.1} parent=1 // pred_check_branch
      %46 = sbr.rel (0) target = $region17
    $region16: #{tpu_custom_call.1} parent=1 // pred_region
      %47 = dma.done [#allocation3], 128
    $region17: #{tpu_custom_call.1} parent=1 // pred_fallthru
      _
    // Predicated region
    $region18: #{tpu_custom_call.1} parent=1 // pred_check
      _
    $region19: #{tpu_custom_call.1} parent=1 // pred_check_branch
      %49 = sbr.rel (0) target = $region21
    $region20: #{tpu_custom_call.1} parent=1 // pred_region
      %50 = dma.done [#allocation6], 6144
    $region21: #{tpu_custom_call.1} parent=1 // pred_fallthru
      _
    // Predicated region
    $region22: #{tpu_custom_call.1} parent=1 // pred_check
      _
    $region23: #{tpu_custom_call.1} parent=1 // pred_check_branch
      %52 = sbr.rel (0) target = $region25
    $region24: #{tpu_custom_call.1} parent=1 // pred_region
      %53 = dma.done [#allocation6], 256
    $region25: #{tpu_custom_call.1} parent=1 // pred_fallthru
      _
    %v54 = vld [vmem:[#allocation7] sm:$0xff]
    %v55 = vld [vmem:[#allocation7 + $0x8] sm:$0x1]
    %v56 = vld [vmem:[#allocation2] sm:$0xff]
    %v57 = vld [vmem:[#allocation5] sm:$0xff]
    %v58 = vld [vmem:[#allocation5 + $0x8] sm:$0xff]
    %v59 = vld [vmem:[#allocation5 + $0x10] sm:$0xff]
    %v60 = vld [vmem:[#allocation5 + $0x18] sm:$0xff]
    %v61 = vlaneseq
    %v62 = vshrl.u32 %v61, 7
    %v63 = vsub.s32 0, %v62
    %v64 = vrot.slane %v54, %v63
    %vm65 = vcmask 261120
    %v67 = vsel %vm65, %v56, 0
    %69 = vmatprep.subr.mxu0 0.0
    %70 = vmatpush1.msra.mxu0 0.0
    %71 = vmatprep.subr.mxu0 0.0
    %72 = vmatpush1.msra.mxu0 0.0
    %73 = vmatprep.subr.mxu0 0.0
    %74 = vmatpush1.msra.mxu0 0.0
    %75 = vmatprep.subr.mxu0 0.0
    %76 = vmatpush1.msra.mxu0 0.0
    %77 = vmatprep.subr.mxu0 0.0
    %78 = vmatpush1.msra.mxu0 0.0
    %79 = vmatprep.subr.mxu0 0.0
    %80 = vmatpush1.msra.mxu0 0.0
    %81 = vmatprep.subr.mxu0 0.0
    %82 = vmatpush1.msra.mxu0 0.0
    %83 = vmatprep.subr.mxu0 0.0
    %84 = vmatpush1.msra.mxu0 0.0
    %85 = vmatprep.subr.mxu0 0.0
    %86 = vmatpush1.msra.mxu0 0.0
    %87 = vmatprep.subr.mxu0 0.0
    %88 = vmatpush1.msra.mxu0 0.0
    %89 = vmatprep.subr.mxu0 0.0
    %90 = vmatpush1.msra.mxu0 0.0
    %91 = vmatprep.subr.mxu0 0.0
    %92 = vmatpush1.msra.mxu0 0.0
    %93 = vmatprep.subr.mxu0 0.0
    %94 = vmatpush1.msra.mxu0 %v60
    %95 = vmatprep.subr.mxu0 0.0
    %96 = vmatpush1.msra.mxu0 %v59
    %97 = vmatprep.subr.mxu0 0.0
    %98 = vmatpush1.msra.mxu0 %v58
    %99 = vmatprep.subr.mxu0 0.0
    %100 = vmatpush1.msra.mxu0 %v57
    %101 = vmatprep.subr.mxu0 0.0
    %102 = vmatpush2.msra.mxu0 0.0
    %103 = vmatprep.subr.mxu0 0.0
    %104 = vmatpush2.msra.mxu0 0.0
    %105 = vmatprep.subr.mxu0 0.0
    %106 = vmatpush2.msra.mxu0 0.0
    %107 = vmatprep.subr.mxu0 0.0
    %108 = vmatpush2.msra.mxu0 0.0
    %109 = vmatprep.subr.mxu0 0.0
    %110 = vmatpush2.msra.mxu0 0.0
    %111 = vmatprep.subr.mxu0 0.0
    %112 = vmatpush2.msra.mxu0 0.0
    %113 = vmatprep.subr.mxu0 0.0
    %114 = vmatpush2.msra.mxu0 0.0
    %115 = vmatprep.subr.mxu0 0.0
    %116 = vmatpush2.msra.mxu0 0.0
    %117 = vmatprep.subr.mxu0 0.0
    %118 = vmatpush2.msra.mxu0 0.0
    %119 = vmatprep.subr.mxu0 0.0
    %120 = vmatpush2.msra.mxu0 0.0
    %121 = vmatprep.subr.mxu0 0.0
    %122 = vmatpush2.msra.mxu0 0.0
    %123 = vmatprep.subr.mxu0 0.0
    %124 = vmatpush2.msra.mxu0 0.0
    %125 = vmatprep.subr.mxu0 0.0
    %126 = vmatpush2.msra.mxu0 0.0
    %127 = vmatprep.subr.mxu0 0.0
    %128 = vmatpush2.msra.mxu0 0.0
    %129 = vmatprep.subr.mxu0 0.0
    %130 = vmatpush2.msra.mxu0 0.0
    %131 = vmatprep.subr.mxu0 0.0
    %132 = vmatpush2.msra.mxu0 0.0
    %133 = vmatprep.mubr.f32.mxu0 0.0
    %134 = vmatmul.mubr.f32.gmra.mxu0 %v67
    %v135 = vpop.f32.mrf.mxu0
    %v136 = vadd.f32 %v64, %v135
    %v137 = vpop.f32.mrf.mxu0
    %138 = vdwg.mxu0
    %v139 = vmax.f32 %v136, 0.0
    %v140 = vrot.slane %v139, 4
    %v141 = vadd.f32 %v139, %v140
    %v142 = vrot.slane %v141, 2
    %v143 = vadd.f32 %v141, %v142
    %v144 = vrot.slane %v143, 1
    %v145 = vadd.f32 %v143, %v144
    %v146 = vmul.f32 %v145, 0.125
    %v147 = vsub.f32 %v139, %v146
    %v148 = vmul.f32 %v147, %v147
    %v149 = vrot.slane %v148, 4
    %v150 = vadd.f32 %v148, %v149
    %v151 = vrot.slane %v150, 2
    %v152 = vadd.f32 %v150, %v151
    %v153 = vrot.slane %v152, 1
    %v154 = vadd.f32 %v152, %v153
    %v155 = vmul.f32 %v154, 0.125
    %v156 = vadd.f32 %v155, 1e-05
    %v157 = vrsqrt.pop %v156
    %v158 = vmul.f32 %v54, %v157
    %v159 = vlaneseq
    %v160 = vshrl.u32 %v159, 7
    %v161 = vsub.s32 1, %v160
    %v162 = vrot.slane %v158, %v161
    %v163 = vmul.f32 %v147, %v162
    %v164 = vlaneseq
    %v165 = vshrl.u32 %v164, 7
    %v166 = vsub.s32 2, %v165
    %v167 = vrot.slane %v54, %v166
    %v168 = vadd.f32 %v163, %v167
    %s169 = scalar_lea.vmem [#allocation5], 128
    %v170 = vld [vmem:[%s169] sm:$0xff]
    %v171 = vld [vmem:[%s169 + $0x8] sm:$0xff]
    %v172 = vld [vmem:[%s169 + $0x10] sm:$0xff]
    %v173 = vld [vmem:[%s169 + $0x18] sm:$0xff]
    %v174 = vld [vmem:[%s169 + $0x20] sm:$0xff]
    %v175 = vld [vmem:[%s169 + $0x28] sm:$0xff]
    %v176 = vld [vmem:[%s169 + $0x30] sm:$0xff]
    %v177 = vld [vmem:[%s169 + $0x38] sm:$0xff]
    %v178 = vld [vmem:[%s169 + $0x40] sm:$0xff]
    %v179 = vld [vmem:[%s169 + $0x48] sm:$0xff]
    %v180 = vld [vmem:[%s169 + $0x50] sm:$0xff]
    %v181 = vld [vmem:[%s169 + $0x58] sm:$0xff]
    %v182 = vld [vmem:[%s169 + $0x60] sm:$0xff]
    %v183 = vld [vmem:[%s169 + $0x68] sm:$0xff]
    %v184 = vld [vmem:[%s169 + $0x70] sm:$0xff]
    %v185 = vld [vmem:[%s169 + $0x78] sm:$0xff]
    %v186 = vlaneseq
    %v187 = vshrl.u32 %v186, 7
    %v188 = vsub.s32 3, %v187
    %v189 = vrot.slane %v54, %v188
    %190 = vmatprep.subr.mxu0 0.0
    %191 = vmatpush1.msra.mxu0 %v185
    %192 = vmatprep.subr.mxu0 0.0
    %193 = vmatpush1.msra.mxu0 %v184
    %194 = vmatprep.subr.mxu0 0.0
    %195 = vmatpush1.msra.mxu0 %v183
    %196 = vmatprep.subr.mxu0 0.0
    %197 = vmatpush1.msra.mxu0 %v182
    %198 = vmatprep.subr.mxu0 0.0
    %199 = vmatpush1.msra.mxu0 %v181
    %200 = vmatprep.subr.mxu0 0.0
    %201 = vmatpush1.msra.mxu0 %v180
    %202 = vmatprep.subr.mxu0 0.0
    %203 = vmatpush1.msra.mxu0 %v179
    %204 = vmatprep.subr.mxu0 0.0
    %205 = vmatpush1.msra.mxu0 %v178
    %206 = vmatprep.subr.mxu0 0.0
    %207 = vmatpush1.msra.mxu0 %v177
    %208 = vmatprep.subr.mxu0 0.0
    %209 = vmatpush1.msra.mxu0 %v176
    %210 = vmatprep.subr.mxu0 0.0
    %211 = vmatpush1.msra.mxu0 %v175
    %212 = vmatprep.subr.mxu0 0.0
    %213 = vmatpush1.msra.mxu0 %v174
    %214 = vmatprep.subr.mxu0 0.0
    %215 = vmatpush1.msra.mxu0 %v173
    %216 = vmatprep.subr.mxu0 0.0
    %217 = vmatpush1.msra.mxu0 %v172
    %218 = vmatprep.subr.mxu0 0.0
    %219 = vmatpush1.msra.mxu0 %v171
    %220 = vmatprep.subr.mxu0 0.0
    %221 = vmatpush1.msra.mxu0 %v170
    %222 = vmatprep.subr.mxu0 0.0
    %223 = vmatpush2.msra.mxu0 0.0
    %224 = vmatprep.subr.mxu0 0.0
    %225 = vmatpush2.msra.mxu0 0.0
    %226 = vmatprep.subr.mxu0 0.0
    %227 = vmatpush2.msra.mxu0 0.0
    %228 = vmatprep.subr.mxu0 0.0
    %229 = vmatpush2.msra.mxu0 0.0
    %230 = vmatprep.subr.mxu0 0.0
    %231 = vmatpush2.msra.mxu0 0.0
    %232 = vmatprep.subr.mxu0 0.0
    %233 = vmatpush2.msra.mxu0 0.0
    %234 = vmatprep.subr.mxu0 0.0
    %235 = vmatpush2.msra.mxu0 0.0
    %236 = vmatprep.subr.mxu0 0.0
    %237 = vmatpush2.msra.mxu0 0.0
    %238 = vmatprep.subr.mxu0 0.0
    %239 = vmatpush2.msra.mxu0 0.0
    %240 = vmatprep.subr.mxu0 0.0
    %241 = vmatpush2.msra.mxu0 0.0
    %242 = vmatprep.subr.mxu0 0.0
    %243 = vmatpush2.msra.mxu0 0.0
    %244 = vmatprep.subr.mxu0 0.0
    %245 = vmatpush2.msra.mxu0 0.0
    %246 = vmatprep.subr.mxu0 0.0
    %247 = vmatpush2.msra.mxu0 0.0
    %248 = vmatprep.subr.mxu0 0.0
    %249 = vmatpush2.msra.mxu0 0.0
    %250 = vmatprep.subr.mxu0 0.0
    %251 = vmatpush2.msra.mxu0 0.0
    %252 = vmatprep.subr.mxu0 0.0
    %253 = vmatpush2.msra.mxu0 0.0
    %254 = vmatprep.mubr.f32.mxu0 0.0
    %255 = vmatmul.mubr.f32.gmra.mxu0 %v168
    %v256 = vpop.f32.mrf.mxu0
    %v257 = vadd.f32 %v189, %v256
    %v258 = vpop.f32.mrf.mxu0
    %259 = vdwg.mxu0
    %v260 = vmax.f32 %v257, 0.0
    %v261 = vrot.slane %v260, 4
    %v262 = vadd.f32 %v260, %v261
    %v263 = vrot.slane %v262, 2
    %v264 = vadd.f32 %v262, %v263
    %v265 = vrot.slane %v264, 1
    %v266 = vadd.f32 %v264, %v265
    %v267 = vmul.f32 %v266, 0.125
    %v268 = vsub.f32 %v260, %v267
    %v269 = vmul.f32 %v268, %v268
    %v270 = vrot.slane %v269, 4
    %v271 = vadd.f32 %v269, %v270
    %v272 = vrot.slane %v271, 2
    %v273 = vadd.f32 %v271, %v272
    %v274 = vrot.slane %v273, 1
    %v275 = vadd.f32 %v273, %v274
    %v276 = vmul.f32 %v275, 0.125
    %v277 = vadd.f32 %v276, 1e-05
    %v278 = vrsqrt.pop %v277
    %v279 = vmul.f32 %v54, %v278
    %v280 = vlaneseq
    %v281 = vshrl.u32 %v280, 7
    %v282 = vsub.s32 4, %v281
    %v283 = vrot.slane %v279, %v282
    %v284 = vmul.f32 %v268, %v283
    %v285 = vlaneseq
    %v286 = vshrl.u32 %v285, 7
    %v287 = vsub.s32 5, %v286
    %v288 = vrot.slane %v54, %v287
    %v289 = vadd.f32 %v284, %v288
    %s290 = scalar_lea.vmem [#allocation5], 256
    %v291 = vld [vmem:[%s290] sm:$0xff]
    %v292 = vld [vmem:[%s290 + $0x8] sm:$0xff]
    %v293 = vld [vmem:[%s290 + $0x10] sm:$0xff]
    %v294 = vld [vmem:[%s290 + $0x18] sm:$0xff]
    %v295 = vld [vmem:[%s290 + $0x20] sm:$0xff]
    %v296 = vld [vmem:[%s290 + $0x28] sm:$0xff]
    %v297 = vld [vmem:[%s290 + $0x30] sm:$0xff]
    %v298 = vld [vmem:[%s290 + $0x38] sm:$0xff]
    %v299 = vld [vmem:[%s290 + $0x40] sm:$0xff]
    %v300 = vld [vmem:[%s290 + $0x48] sm:$0xff]
    %v301 = vld [vmem:[%s290 + $0x50] sm:$0xff]
    %v302 = vld [vmem:[%s290 + $0x58] sm:$0xff]
    %v303 = vld [vmem:[%s290 + $0x60] sm:$0xff]
    %v304 = vld [vmem:[%s290 + $0x68] sm:$0xff]
    %v305 = vld [vmem:[%s290 + $0x70] sm:$0xff]
    %v306 = vld [vmem:[%s290 + $0x78] sm:$0xff]
    %v307 = vlaneseq
    %v308 = vshrl.u32 %v307, 7
    %v309 = vsub.s32 6, %v308
    %v310 = vrot.slane %v54, %v309
    %311 = vmatprep.subr.mxu0 0.0
    %312 = vmatpush1.msra.mxu0 %v306
    %313 = vmatprep.subr.mxu0 0.0
    %314 = vmatpush1.msra.mxu0 %v305
    %315 = vmatprep.subr.mxu0 0.0
    %316 = vmatpush1.msra.mxu0 %v304
    %317 = vmatprep.subr.mxu0 0.0
    %318 = vmatpush1.msra.mxu0 %v303
    %319 = vmatprep.subr.mxu0 0.0
    %320 = vmatpush1.msra.mxu0 %v302
    %321 = vmatprep.subr.mxu0 0.0
    %322 = vmatpush1.msra.mxu0 %v301
    %323 = vmatprep.subr.mxu0 0.0
    %324 = vmatpush1.msra.mxu0 %v300
    %325 = vmatprep.subr.mxu0 0.0
    %326 = vmatpush1.msra.mxu0 %v299
    %327 = vmatprep.subr.mxu0 0.0
    %328 = vmatpush1.msra.mxu0 %v298
    %329 = vmatprep.subr.mxu0 0.0
    %330 = vmatpush1.msra.mxu0 %v297
    %331 = vmatprep.subr.mxu0 0.0
    %332 = vmatpush1.msra.mxu0 %v296
    %333 = vmatprep.subr.mxu0 0.0
    %334 = vmatpush1.msra.mxu0 %v295
    %335 = vmatprep.subr.mxu0 0.0
    %336 = vmatpush1.msra.mxu0 %v294
    %337 = vmatprep.subr.mxu0 0.0
    %338 = vmatpush1.msra.mxu0 %v293
    %339 = vmatprep.subr.mxu0 0.0
    %340 = vmatpush1.msra.mxu0 %v292
    %341 = vmatprep.subr.mxu0 0.0
    %342 = vmatpush1.msra.mxu0 %v291
    %343 = vmatprep.subr.mxu0 0.0
    %344 = vmatpush2.msra.mxu0 0.0
    %345 = vmatprep.subr.mxu0 0.0
    %346 = vmatpush2.msra.mxu0 0.0
    %347 = vmatprep.subr.mxu0 0.0
    %348 = vmatpush2.msra.mxu0 0.0
    %349 = vmatprep.subr.mxu0 0.0
    %350 = vmatpush2.msra.mxu0 0.0
    %351 = vmatprep.subr.mxu0 0.0
    %352 = vmatpush2.msra.mxu0 0.0
    %353 = vmatprep.subr.mxu0 0.0
    %354 = vmatpush2.msra.mxu0 0.0
    %355 = vmatprep.subr.mxu0 0.0
    %356 = vmatpush2.msra.mxu0 0.0
    %357 = vmatprep.subr.mxu0 0.0
    %358 = vmatpush2.msra.mxu0 0.0
    %359 = vmatprep.subr.mxu0 0.0
    %360 = vmatpush2.msra.mxu0 0.0
    %361 = vmatprep.subr.mxu0 0.0
    %362 = vmatpush2.msra.mxu0 0.0
    %363 = vmatprep.subr.mxu0 0.0
    %364 = vmatpush2.msra.mxu0 0.0
    %365 = vmatprep.subr.mxu0 0.0
    %366 = vmatpush2.msra.mxu0 0.0
    %367 = vmatprep.subr.mxu0 0.0
    %368 = vmatpush2.msra.mxu0 0.0
    %369 = vmatprep.subr.mxu0 0.0
    %370 = vmatpush2.msra.mxu0 0.0
    %371 = vmatprep.subr.mxu0 0.0
    %372 = vmatpush2.msra.mxu0 0.0
    %373 = vmatprep.subr.mxu0 0.0
    %374 = vmatpush2.msra.mxu0 0.0
    %375 = vmatprep.mubr.f32.mxu0 0.0
    %376 = vmatmul.mubr.f32.gmra.mxu0 %v289
    %v377 = vpop.f32.mrf.mxu0
    %v378 = vadd.f32 %v310, %v377
    %v379 = vpop.f32.mrf.mxu0
    %380 = vdwg.mxu0
    %v381 = vmax.f32 %v378, 0.0
    %v382 = vrot.slane %v381, 4
    %v383 = vadd.f32 %v381, %v382
    %v384 = vrot.slane %v383, 2
    %v385 = vadd.f32 %v383, %v384
    %v386 = vrot.slane %v385, 1
    %v387 = vadd.f32 %v385, %v386
    %v388 = vmul.f32 %v387, 0.125
    %v389 = vsub.f32 %v381, %v388
    %v390 = vmul.f32 %v389, %v389
    %v391 = vrot.slane %v390, 4
    %v392 = vadd.f32 %v390, %v391
    %v393 = vrot.slane %v392, 2
    %v394 = vadd.f32 %v392, %v393
    %v395 = vrot.slane %v394, 1
    %v396 = vadd.f32 %v394, %v395
    %v397 = vmul.f32 %v396, 0.125
    %v398 = vadd.f32 %v397, 1e-05
    %v399 = vrsqrt.pop %v398
    %v400 = vmul.f32 %v54, %v399
    %v401 = vlaneseq
    %v402 = vshrl.u32 %v401, 7
    %v403 = vsub.s32 7, %v402
    %v404 = vrot.slane %v400, %v403
    %v405 = vmul.f32 %v389, %v404
    %v406 = vlaneseq
    %v407 = vshrl.u32 %v406, 7
    %v408 = vsub.s32 0, %v407
    %v409 = vrot.slane %v55, %v408
    %v410 = vadd.f32 %v405, %v409
    %vm411 = vcmask 130048
    %412 = vst.msk [vmem:[#allocation8] sm:$0xff] %vm411, %v410
    // Predicated region
    $region26: #{tpu_custom_call.1} parent=1 // pred_check
      _
    $region27: #{tpu_custom_call.1} parent=1 // pred_check_branch
      %414 = sbr.rel (0) target = $region29
    $region28: #{tpu_custom_call.1} parent=1 // pred_region
      %s416 = ssub.s32 128, 128
      %417 = vsyncadd [#allocation4], %s416
      %s419 = sshll.u32 [#allocation8], 4
      %s420 = int_to_ptr.vmem [resolvable:$true] %s419
      %422 = dma.vmem_to_hbm [thread:$0]  %s420, 128, %s3, [#allocation4]
    $region29: #{tpu_custom_call.1} parent=1 // pred_fallthru
      _
    // Predicated region
    $region30: #{tpu_custom_call.1} parent=1 // pred_check
      _
    $region31: #{tpu_custom_call.1} parent=1 // pred_check_branch
      %424 = sbr.rel (0) target = $region33
    $region32: #{tpu_custom_call.1} parent=1 // pred_region
      %425 = dma.done [#allocation4], 128
    $region33: #{tpu_custom_call.1} parent=1 // pred_fallthru
      _
    %426 = vsyncpa [#allocation3], 1
    %427 = vsyncpa [#allocation6], 1
    %428 = vsyncpa [#allocation4], 1

</llo_original>
